<compile_context>
chip_gen: v7x
topology: tpu7x:2x2x1
jax: 0.10.0
libtpu: 0.0.40
codegen_flags: <defaults>
</compile_context>

<pallas_src>
import jax
import jax.numpy as jnp
from jax.experimental import pallas as pl
from jax.experimental.pallas import tpu as pltpu

_MAX_BATCH_TILE = 1024          # rows per grid step (~12 MiB pipeline footprint @ f32)
_VMEM_LIMIT_BYTES = 32 * 1024 * 1024   # covers the 1024-row tile on v5e too


def _round_up(x: int, m: int) -> int:
    return ((x + m - 1) // m) * m


def _is_equal_kernel(m1_ref, m2_ref, o_ref):
    # |mask1 - mask2| reduced over all 729 channel/spatial positions per row
    # (== the all-ones 9x9x9 conv).  sub/abs in the native float dtype
    # (bf16-friendly on v6e/v7x); accumulate the reduction in f32.
    m1 = m1_ref[...]
    m2 = m2_ref[...]
    if jnp.issubdtype(m1.dtype, jnp.floating):
        diff = jnp.abs(m1 - m2)                                   # (TN, 729)
    else:
        diff = jnp.abs(m1.astype(jnp.int32) - m2.astype(jnp.int32))
    o_ref[...] = jnp.sum(diff, axis=-1, keepdims=True, dtype=jnp.float32)


def sudoku_is_equal(mask1: jax.Array, mask2: jax.Array, bias: jax.Array) -> jax.Array:
    """mask1, mask2: (N, 9, 9, 9) arrays (NCHW). Returns (N, 1, 1, 1)."""
    assert mask1.shape == mask2.shape
    n, c, h, w = mask1.shape
    assert (c, h, w) == (9, 9, 9)
    flat = c * h * w  # 729

    m1 = mask1.reshape(n, flat)
    m2 = mask2.reshape(n, flat)

    # Batch tile:
    #   n <= 8          -> full batch (block == full dim is always legal).
    #   otherwise       -> at least 2 grid steps (v7x megacore), multiple of 8
    #                      sublanes, capped at _MAX_BATCH_TILE.  Edge tile
    #                      handled by cdiv (padding is per-row safe).
    if n <= 8:
        tn = n
    else:
        tn = min(_MAX_BATCH_TILE, _round_up(pl.cdiv(n, 2), 8))
    grid = (pl.cdiv(n, tn),)

    itemsize = jnp.dtype(mask1.dtype).itemsize
    cost = pl.CostEstimate(
        flops=3 * n * flat,                       # sub + abs + add per element
        transcendentals=0,
        bytes_accessed=2 * n * flat * itemsize + n * 4,
    )

    out = pl.pallas_call(
        _is_equal_kernel,
        out_shape=jax.ShapeDtypeStruct((n, 1), jnp.float32),  # f32 always: no overflow/rounding
        grid=grid,
        in_specs=[
            pl.BlockSpec((tn, flat), lambda i: (i, 0)),
            pl.BlockSpec((tn, flat), lambda i: (i, 0)),
        ],
        out_specs=pl.BlockSpec((tn, 1), lambda i: (i, 0)),
        compiler_params=pltpu.CompilerParams(
            dimension_semantics=("parallel",),
            vmem_limit_bytes=_VMEM_LIMIT_BYTES,
        ),
        cost_estimate=cost,
    )(m1, m2)

    # Conv bias (zero-initialized in the module) folded in outside the kernel.
    out = out + bias.reshape(1, 1).astype(jnp.float32)

    # Match the module's output dtype for floating inputs; keep f32 otherwise
    # (int masks would overflow / PyTorch Conv2d would not support them anyway).
    if jnp.issubdtype(mask1.dtype, jnp.floating):
        out = out.astype(mask1.dtype)
    return out.reshape(n, 1, 1, 1)


if __name__ == "__main__":
    key = jax.random.PRNGKey(0)
    k1, k2 = jax.random.split(key)

    # Deterministic parameter init (matches the module's __init__):
    # conv weight is all-ones (folded into the reduction), bias is zeros.
    bias = jnp.zeros((1,), dtype=jnp.float32)

    # --- small smoke test (N=2, f32), matches the module's expected shapes ---
    N = 2
    mask1 = (jax.random.uniform(k1, (N, 9, 9, 9)) > 0.5).astype(jnp.float32)
    mask2 = (jax.random.uniform(k2, (N, 9, 9, 9)) > 0.5).astype(jnp.float32)

    out = sudoku_is_equal(mask1, mask2, bias)
    out = jax.block_until_ready(out)
    ref = jnp.sum(jnp.abs(mask1 - mask2), axis=(1, 2, 3), keepdims=True) + bias[0]
    assert out.shape == (N, 1, 1, 1), out.shape
    assert jnp.allclose(out, ref, atol=1e-5), (out, ref)

    # --- multi-tile path (N=24 -> tn=16, grid=2, partial last tile) ---
    N2 = 24
    k3, k4 = jax.random.split(k2)
    b1 = (jax.random.uniform(k3, (N2, 9, 9, 9)) > 0.5).astype(jnp.float32)
    b2 = (jax.random.uniform(k4, (N2, 9, 9, 9)) > 0.5).astype(jnp.float32)
    out2 = jax.block_until_ready(sudoku_is_equal(b1, b2, bias))
    ref2 = jnp.sum(jnp.abs(b1 - b2), axis=(1, 2, 3), keepdims=True) + bias[0]
    assert out2.shape == (N2, 1, 1, 1), out2.shape
    assert jnp.allclose(out2, ref2, atol=1e-5), (out2, ref2)

    # --- narrow-dtype path (bf16 masks halve HBM traffic; f32 accumulation) ---
    out3 = jax.block_until_ready(sudoku_is_equal(
        b1.astype(jnp.bfloat16), b2.astype(jnp.bfloat16), bias))
    assert out3.shape == (N2, 1, 1, 1), out3.shape
    assert jnp.allclose(out3.astype(jnp.float32), ref2, atol=2.0), (out3, ref2)

    print("KERNEL_OK")
</pallas_src>

<mosaic_0001>
module attributes {stable_mosaic.version = 11 : i64} {
  func.func @_is_equal_kernel(%arg0: i32, %arg1: memref<2x729xf32, #tpu.memory_space<vmem>>, %arg2: memref<2x729xf32, #tpu.memory_space<vmem>>, %arg3: memref<2x1xf32, #tpu.memory_space<vmem>>) attributes {dimension_semantics = [#tpu.dimension_semantics<parallel>], iteration_bounds = array<i64: 1>, scalar_prefetch = 0 : i64, scratch_operands = 0 : i64, tpu.core_type = #tpu.core_type<tc>, window_params = [{transform_indices = @transform_0, window_bounds = array<i64: 2, 729>}, {transform_indices = @transform_1, window_bounds = array<i64: 2, 729>}, {transform_indices = @transform_2, window_bounds = array<i64: 2, 1>}]} {
    %c0 = arith.constant 0 : index
    %c0_0 = arith.constant 0 : index
    %0 = vector.load %arg1[%c0, %c0_0] : memref<2x729xf32, #tpu.memory_space<vmem>>, vector<2x729xf32>
    %c0_1 = arith.constant 0 : index
    %c0_2 = arith.constant 0 : index
    %1 = vector.load %arg2[%c0_1, %c0_2] : memref<2x729xf32, #tpu.memory_space<vmem>>, vector<2x729xf32>
    %2 = arith.subf %0, %1 : vector<2x729xf32>
    %3 = math.absf %2 : vector<2x729xf32>
    %cst = arith.constant dense<0.000000e+00> : vector<2xf32>
    %4 = vector.multi_reduction <add>, %3, %cst [1] : vector<2x729xf32> to vector<2xf32>
    %5 = vector.shape_cast %4 : vector<2xf32> to vector<2x1xf32>
    %c0_3 = arith.constant 0 : index
    %c0_4 = arith.constant 0 : index
    %6 = vector.load %arg3[%c0_3, %c0_4] : memref<2x1xf32, #tpu.memory_space<vmem>>, vector<2x1xf32>
    tpu.vector_store %arg3[%c0_3, %c0_4], %5 {strides = array<i32>} : memref<2x1xf32, #tpu.memory_space<vmem>>, vector<2x1xf32>,
    return
  }
  func.func @transform_0(%arg0: i32) -> (i32, i32) {
    %c0_i32 = arith.constant 0 : i32
    %c0_i32_0 = arith.constant 0 : i32
    return %arg0, %c0_i32 : i32, i32
  }
  func.func @transform_1(%arg0: i32) -> (i32, i32) {
    %c0_i32 = arith.constant 0 : i32
    %c0_i32_0 = arith.constant 0 : i32
    return %arg0, %c0_i32 : i32, i32
  }
  func.func @transform_2(%arg0: i32) -> (i32, i32) {
    %c0_i32 = arith.constant 0 : i32
    %c0_i32_0 = arith.constant 0 : i32
    return %arg0, %c0_i32 : i32, i32
  }
}

</mosaic_0001>

<llo_original>
// kernel: tpu_custom_call.1
$region0: #{tpu_custom_call.1}
  #allocation0 [shape = 'u32[]', space=smem, size = 0x4, offset = 0x4, fixed_abs, tag = 'smem constant byte address 0x4 - core index']
  #allocation1 [shape = 'u32[144,128]{1,0:T(1,128)}', space=vmem, size = 0x12000, scoped, tag = 'internal scratch']
  %s0 = inlined_call_operand.hbm [shape: f32[2,729], index: 0, kind: input, shape index: {}]
  %s1 = inlined_call_operand.hbm [shape: f32[2,729], index: 1, kind: input, shape index: {}]
  %s2 = inlined_call_operand.vmem [shape: f32[2,1], index: 2, kind: output, shape index: {}]
  %s3 = sld [smem:[#allocation0]]
  $region26: #{tpu_custom_call.1} parent=0
    _
  %s5 = ssub.s32 1, %s3
  %s6 = scalar_select 0, %s5, %s3
  $region1: #{tpu_custom_call.1} parent=0
    #allocation2 [shape = 'u8[6144]{0}', space=vmem, size = 0x1800, scoped, tag = 'input window, operand 0, single buffered']
    #allocation3 [shape = 's32[1]{0}', space=sflag, size = 0x4, scoped, tag = 'scoped memory for tpu_custom_call.1']
    #allocation4 [shape = 'u8[6144]{0}', space=vmem, size = 0x1800, scoped, tag = 'input window, operand 1, single buffered']
    #allocation5 [shape = 's32[1]{0}', space=sflag, size = 0x4, scoped, tag = 'scoped memory for tpu_custom_call.1']
    %7 = vsyncpa [#allocation3], 0
    %8 = vsyncpa [#allocation5], 0
    // Predicated region
    $region2: #{tpu_custom_call.1} parent=1 // pred_check
      _
    $region3: #{tpu_custom_call.1} parent=1 // pred_check_branch
      %10 = sbr.rel (0) target = $region5
    $region4: #{tpu_custom_call.1} parent=1 // pred_region
      %s12 = ssub.s32 192, 192
      %13 = vsyncadd [#allocation3], %s12
      %s15 = sshll.u32 [#allocation2], 4
      %s16 = int_to_ptr.vmem [resolvable:$true] %s15
      %18 = dma.hbm_to_vmem [thread:$0]  %s0, 192, %s16, [#allocation3]
    $region5: #{tpu_custom_call.1} parent=1 // pred_fallthru
      _
    // Predicated region
    $region6: #{tpu_custom_call.1} parent=1 // pred_check
      _
    $region7: #{tpu_custom_call.1} parent=1 // pred_check_branch
      %20 = sbr.rel (0) target = $region9
    $region8: #{tpu_custom_call.1} parent=1 // pred_region
      %s22 = ssub.s32 192, 192
      %23 = vsyncadd [#allocation5], %s22
      %s25 = sshll.u32 [#allocation4], 4
      %s26 = int_to_ptr.vmem [resolvable:$true] %s25
      %28 = dma.hbm_to_vmem [thread:$0]  %s1, 192, %s26, [#allocation5]
    $region9: #{tpu_custom_call.1} parent=1 // pred_fallthru
      _
    // Predicated region
    $region10: #{tpu_custom_call.1} parent=1 // pred_check
      _
    $region11: #{tpu_custom_call.1} parent=1 // pred_check_branch
      %30 = sbr.rel (0) target = $region13
    $region12: #{tpu_custom_call.1} parent=1 // pred_region
      %31 = dma.done [#allocation3], 192
    $region13: #{tpu_custom_call.1} parent=1 // pred_fallthru
      _
    // Predicated region
    $region14: #{tpu_custom_call.1} parent=1 // pred_check
      _
    $region15: #{tpu_custom_call.1} parent=1 // pred_check_branch
      %33 = sbr.rel (0) target = $region17
    $region16: #{tpu_custom_call.1} parent=1 // pred_region
      %34 = dma.done [#allocation5], 192
    $region17: #{tpu_custom_call.1} parent=1 // pred_fallthru
      _
    %v35 = vld [vmem:[#allocation2] sm:$0xff]
    %v36 = vld [vmem:[#allocation2 + $0x8] sm:$0xf]
    %v37 = vld [vmem:[#allocation4] sm:$0xff]
    %v38 = vld [vmem:[#allocation4 + $0x8] sm:$0xf]
    %v39 = vsub.f32 %v35, %v37
    %v40 = vsub.f32 %v36, %v38
    %v41 = vand.u32 2147483647, %v39
    %v42 = vand.u32 2147483647, %v40
    %v45 = vcombine.high %v41, %v41
    %v47 = vunpack.c.l.s4 1983009808
    %v48 = vunpack.c.0.s8 %v47
    %v49 = vlaneseq
    %v50 = vshrl.u32 %v49, 7
    %v51 = vsub.s32 %v48, %v50
    %v52 = vrot.slane %v41, %v51
    %v54 = vunpack.c.l.s4 1983009808
    %v55 = vunpack.c.0.s8 %v54
    %v56 = vlaneseq
    %v57 = vshrl.u32 %v56, 7
    %v58 = vsub.s32 %v55, %v57
    %v59 = vrot.slane %v45, %v58
    %v60 = vcombine.high %v52, %v52
    %v61 = vcombine.high %v59, %v59
    %v63 = vunpack.c.l.s4 1983009808
    %v64 = vunpack.c.0.s8 %v63
    %v65 = vlaneseq
    %v66 = vshrl.u32 %v65, 7
    %v67 = vsub.s32 %v64, %v66
    %v68 = vrot.slane %v42, %v67
    %v69 = vcombine.high %v68, %v68
    %vm76 = vcmask 1041408
    %v77 = vsel %vm76, %v52, 0.0
    %v78 = vsel %vm76, %v60, 0.0
    %v79 = vadd.f32 %v77, %v78
    %v80 = vsel %vm76, %v59, 0.0
    %v81 = vadd.f32 %v79, %v80
    %v82 = vsel %vm76, %v61, 0.0
    %v83 = vadd.f32 %v81, %v82
    %v84 = vsel %vm76, %v68, 0.0
    %v85 = vadd.f32 %v83, %v84
    %vm86 = vcmask 721920
    %v87 = vsel %vm86, %v69, 0.0
    %v88 = vadd.f32 %v85, %v87
    %89 = vadd.xlane.f32.xlu0 %v88
    %v90 = vpop.xlane.xlu0 %89
    %vm91 = vcmask 1024
    %92 = vst.msk [vmem:[%s2] sm:$0x3] %vm91, %v90
    // Predicated region
    $region18: #{tpu_custom_call.1} parent=1 // pred_check
      _
    $region19: #{tpu_custom_call.1} parent=1 // pred_check_branch
      %94 = sbr.rel (0) target = $region21
    $region20: #{tpu_custom_call.1} parent=1 // pred_region
      _
    $region21: #{tpu_custom_call.1} parent=1 // pred_fallthru
      _
    // Predicated region
    $region22: #{tpu_custom_call.1} parent=1 // pred_check
      _
    $region23: #{tpu_custom_call.1} parent=1 // pred_check_branch
      %96 = sbr.rel (0) target = $region25
    $region24: #{tpu_custom_call.1} parent=1 // pred_region
      _
    $region25: #{tpu_custom_call.1} parent=1 // pred_fallthru
      _
    %97 = vsyncpa [#allocation3], 1
    %98 = vsyncpa [#allocation5], 1

</llo_original>
